<compile_context>
chip_gen: v7x
topology: tpu7x:2x2x1
jax: 0.10.0
libtpu: 0.0.40
codegen_flags: <defaults>
</compile_context>

<pallas_src>
import jax
import jax.numpy as jnp
from jax.experimental import pallas as pl
from jax.experimental.pallas import tpu as pltpu


# ------------------------------ Pallas kernel ------------------------------ #

def _make_mlp_kernel(num_linear):
    """Fused MLP kernel: x @ W1 + b1 -> ReLU -> ... -> @ W_last + b_last."""

    def kernel(*refs):
        # refs = (x_ref, w1_ref, b1_ref, ..., wL_ref, bL_ref, o_ref)
        x_ref = refs[0]
        o_ref = refs[-1]
        h = x_ref[...]
        for i in range(num_linear):
            w_ref = refs[1 + 2 * i]
            b_ref = refs[2 + 2 * i]
            h = jnp.dot(h, w_ref[...],
                        preferred_element_type=jnp.float32) + b_ref[...]
            if i < num_linear - 1:          # ReLU after every Linear but the last
                h = jnp.maximum(h, 0.0)
        o_ref[...] = h

    return kernel


# ------------------------------ wrapper ------------------------------------ #

def mlp_forward(x, params):
    """params: tuple of (w, b) pairs in PyTorch layout (w: (out, in), b: (out,))."""
    n = x.shape[0]
    x2 = x.reshape(n, -1).astype(jnp.float32)            # x.view(x.size(0), -1)

    num_linear = len(params)
    out_dim = params[-1][0].shape[0]

    # Flatten to kernel operand list; transpose weights to (in, out) once.
    args = [x2]
    flops = 0
    bytes_accessed = x2.size * 4 + n * out_dim * 4
    for (w, b) in params:
        args.append(jnp.transpose(w, (1, 0)).astype(jnp.float32))   # (in, out)
        args.append(b.reshape(1, -1).astype(jnp.float32))           # (1, out)
        flops += 2 * n * w.shape[1] * w.shape[0]
        bytes_accessed += (w.size + b.size) * 4

    vmem_spec = pl.BlockSpec(memory_space=pltpu.MemorySpace.VMEM)

    return pl.pallas_call(
        _make_mlp_kernel(num_linear),
        out_shape=jax.ShapeDtypeStruct((n, out_dim), jnp.float32),
        in_specs=[vmem_spec] * len(args),
        out_specs=vmem_spec,
        compiler_params=pltpu.CompilerParams(
            vmem_limit_bytes=8 * 1024 * 1024),            # tiny footprint, lots of headroom
        cost_estimate=pl.CostEstimate(
            flops=flops, transcendentals=0, bytes_accessed=bytes_accessed),
    )(*args)


# --------------------------- deterministic params --------------------------- #

def init_params(key, input_size=28 * 28, hidden_dim=32, num_classes=10,
                num_layers=2):
    """Mimics PyTorch nn.Linear default init: U(-1/sqrt(fan_in), 1/sqrt(fan_in))."""
    dims = [input_size] + [hidden_dim] * (num_layers + 1) + [num_classes]
    params = []
    for fan_in, fan_out in zip(dims[:-1], dims[1:]):
        key, kw, kb = jax.random.split(key, 3)
        bound = 1.0 / (fan_in ** 0.5)
        w = jax.random.uniform(kw, (fan_out, fan_in), jnp.float32, -bound, bound)
        b = jax.random.uniform(kb, (fan_out,), jnp.float32, -bound, bound)
        params.append((w, b))
    return tuple(params)


def _reference_forward(x, params):
    """Pure-JAX reference of the PyTorch module (for a correctness sanity check)."""
    h = x.reshape(x.shape[0], -1).astype(jnp.float32)
    for i, (w, b) in enumerate(params):
        h = h @ w.T + b
        if i < len(params) - 1:
            h = jnp.maximum(h, 0.0)
    return h


# ---------------------------------- main ------------------------------------ #

if __name__ == "__main__":
    key = jax.random.PRNGKey(0)
    pkey, xkey = jax.random.split(key)

    params = init_params(pkey, input_size=28 * 28, hidden_dim=32,
                         num_classes=10, num_layers=2)
    # MNIST-like input, batch=2 (NCHW like PyTorch); forward flattens it.
    x = jax.random.normal(xkey, (2, 1, 28, 28), jnp.float32)

    logits = jax.jit(mlp_forward)(x, params)
    jax.block_until_ready(logits)

    ref = _reference_forward(x, params)
    assert logits.shape == (2, 10)
    assert bool(jnp.all(jnp.isfinite(logits)))
    assert bool(jnp.allclose(logits, ref, atol=1e-4, rtol=1e-4))
    print("KERNEL_OK")
</pallas_src>

<mosaic_0001>
module attributes {stable_mosaic.version = 11 : i64} {
  func.func @kernel(%arg0: memref<2x784xf32, #tpu.memory_space<vmem>>, %arg1: memref<784x32xf32, #tpu.memory_space<vmem>>, %arg2: memref<1x32xf32, #tpu.memory_space<vmem>>, %arg3: memref<32x32xf32, #tpu.memory_space<vmem>>, %arg4: memref<1x32xf32, #tpu.memory_space<vmem>>, %arg5: memref<32x32xf32, #tpu.memory_space<vmem>>, %arg6: memref<1x32xf32, #tpu.memory_space<vmem>>, %arg7: memref<32x10xf32, #tpu.memory_space<vmem>>, %arg8: memref<1x10xf32, #tpu.memory_space<vmem>>, %arg9: memref<2x10xf32, #tpu.memory_space<vmem>>) attributes {dimension_semantics = [], scalar_prefetch = 0 : i64, scratch_operands = 0 : i64, tpu.core_type = #tpu.core_type<tc>} {
    %c0 = arith.constant 0 : index
    %c0_0 = arith.constant 0 : index
    %0 = vector.load %arg0[%c0, %c0_0] : memref<2x784xf32, #tpu.memory_space<vmem>>, vector<2x784xf32>
    %c0_1 = arith.constant 0 : index
    %c0_2 = arith.constant 0 : index
    %1 = vector.load %arg1[%c0_1, %c0_2] : memref<784x32xf32, #tpu.memory_space<vmem>>, vector<784x32xf32>
    %cst = arith.constant dense<0.000000e+00> : vector<2x32xf32>
    %2 = tpu.matmul %0, %1, %cst {dimension_numbers = #tpu.dot_dimension_numbers<[1], [0], [0], [1], [0, 0, 1, 1], [], []>} : vector<2x784xf32>, vector<784x32xf32>, vector<2x32xf32> -> vector<2x32xf32>
    %c0_3 = arith.constant 0 : index
    %c0_4 = arith.constant 0 : index
    %3 = vector.load %arg2[%c0_3, %c0_4] : memref<1x32xf32, #tpu.memory_space<vmem>>, vector<1x32xf32>
    %4 = vector.broadcast %3 : vector<1x32xf32> to vector<2x32xf32>
    %5 = arith.addf %2, %4 : vector<2x32xf32>
    %cst_5 = arith.constant 0.000000e+00 : f32
    %6 = vector.broadcast %cst_5 : f32 to vector<2x32xf32>
    %7 = arith.maximumf %5, %6 : vector<2x32xf32>
    %c0_6 = arith.constant 0 : index
    %c0_7 = arith.constant 0 : index
    %8 = vector.load %arg3[%c0_6, %c0_7] : memref<32x32xf32, #tpu.memory_space<vmem>>, vector<32x32xf32>
    %cst_8 = arith.constant dense<0.000000e+00> : vector<2x32xf32>
    %9 = tpu.matmul %7, %8, %cst_8 {dimension_numbers = #tpu.dot_dimension_numbers<[1], [0], [0], [1], [0, 0, 1, 1], [], []>} : vector<2x32xf32>, vector<32x32xf32>, vector<2x32xf32> -> vector<2x32xf32>
    %c0_9 = arith.constant 0 : index
    %c0_10 = arith.constant 0 : index
    %10 = vector.load %arg4[%c0_9, %c0_10] : memref<1x32xf32, #tpu.memory_space<vmem>>, vector<1x32xf32>
    %11 = vector.broadcast %10 : vector<1x32xf32> to vector<2x32xf32>
    %12 = arith.addf %9, %11 : vector<2x32xf32>
    %cst_11 = arith.constant 0.000000e+00 : f32
    %13 = vector.broadcast %cst_11 : f32 to vector<2x32xf32>
    %14 = arith.maximumf %12, %13 : vector<2x32xf32>
    %c0_12 = arith.constant 0 : index
    %c0_13 = arith.constant 0 : index
    %15 = vector.load %arg5[%c0_12, %c0_13] : memref<32x32xf32, #tpu.memory_space<vmem>>, vector<32x32xf32>
    %cst_14 = arith.constant dense<0.000000e+00> : vector<2x32xf32>
    %16 = tpu.matmul %14, %15, %cst_14 {dimension_numbers = #tpu.dot_dimension_numbers<[1], [0], [0], [1], [0, 0, 1, 1], [], []>} : vector<2x32xf32>, vector<32x32xf32>, vector<2x32xf32> -> vector<2x32xf32>
    %c0_15 = arith.constant 0 : index
    %c0_16 = arith.constant 0 : index
    %17 = vector.load %arg6[%c0_15, %c0_16] : memref<1x32xf32, #tpu.memory_space<vmem>>, vector<1x32xf32>
    %18 = vector.broadcast %17 : vector<1x32xf32> to vector<2x32xf32>
    %19 = arith.addf %16, %18 : vector<2x32xf32>
    %cst_17 = arith.constant 0.000000e+00 : f32
    %20 = vector.broadcast %cst_17 : f32 to vector<2x32xf32>
    %21 = arith.maximumf %19, %20 : vector<2x32xf32>
    %c0_18 = arith.constant 0 : index
    %c0_19 = arith.constant 0 : index
    %22 = vector.load %arg7[%c0_18, %c0_19] : memref<32x10xf32, #tpu.memory_space<vmem>>, vector<32x10xf32>
    %cst_20 = arith.constant dense<0.000000e+00> : vector<2x10xf32>
    %23 = tpu.matmul %21, %22, %cst_20 {dimension_numbers = #tpu.dot_dimension_numbers<[1], [0], [0], [1], [0, 0, 1, 1], [], []>} : vector<2x32xf32>, vector<32x10xf32>, vector<2x10xf32> -> vector<2x10xf32>
    %c0_21 = arith.constant 0 : index
    %c0_22 = arith.constant 0 : index
    %24 = vector.load %arg8[%c0_21, %c0_22] : memref<1x10xf32, #tpu.memory_space<vmem>>, vector<1x10xf32>
    %25 = vector.broadcast %24 : vector<1x10xf32> to vector<2x10xf32>
    %26 = arith.addf %23, %25 : vector<2x10xf32>
    %c0_23 = arith.constant 0 : index
    %c0_24 = arith.constant 0 : index
    %27 = vector.load %arg9[%c0_23, %c0_24] : memref<2x10xf32, #tpu.memory_space<vmem>>, vector<2x10xf32>
    tpu.vector_store %arg9[%c0_23, %c0_24], %26 {strides = array<i32>} : memref<2x10xf32, #tpu.memory_space<vmem>>, vector<2x10xf32>,
    return
  }
}

</mosaic_0001>

<llo_original>
// kernel: mlp_forward.1
$region0: #{mlp_forward.1}
  #allocation0 [shape = 'u32[]', space=smem, size = 0x4, offset = 0x4, fixed_abs, tag = 'smem constant byte address 0x4 - core index']
  #allocation1 [shape = 'u32[144,128]{1,0:T(1,128)}', space=vmem, size = 0x12000, scoped, tag = 'internal scratch']
  %s0 = inlined_call_operand.vmem [shape: f32[2,784], index: 0, kind: input, shape index: {}]
  %s1 = inlined_call_operand.vmem [shape: f32[784,32], index: 1, kind: input, shape index: {}]
  %s2 = inlined_call_operand.vmem [shape: f32[1,32], index: 2, kind: input, shape index: {}]
  %s3 = inlined_call_operand.vmem [shape: f32[32,32], index: 3, kind: input, shape index: {}]
  %s4 = inlined_call_operand.vmem [shape: f32[1,32], index: 4, kind: input, shape index: {}]
  %s5 = inlined_call_operand.vmem [shape: f32[32,32], index: 5, kind: input, shape index: {}]
  %s6 = inlined_call_operand.vmem [shape: f32[1,32], index: 6, kind: input, shape index: {}]
  %s7 = inlined_call_operand.vmem [shape: f32[32,10], index: 7, kind: input, shape index: {}]
  %s8 = inlined_call_operand.vmem [shape: f32[1,10], index: 8, kind: input, shape index: {}]
  %s9 = inlined_call_operand.hbm [shape: f32[2,10], index: 9, kind: output, shape index: {}]
  %s10 = sld [smem:[#allocation0]]
  $region46: #{mlp_forward.1} parent=0
    _
  %s12 = ssub.s32 1, %s10
  %s13 = scalar_select 0, %s12, %s10
  $region1: #{mlp_forward.1} parent=0
    #allocation2 [shape = 'u8[1024]{0}', space=vmem, size = 0x400, scoped, tag = 'output window, operand 0, single buffered']
    #allocation3 [shape = 's32[1]{0}', space=sflag, size = 0x4, scoped, tag = 'scoped memory for mlp_forward.1']
    %14 = vsyncpa [#allocation3], 0
    // Predicated region
    $region2: #{mlp_forward.1} parent=1 // pred_check
      _
    $region3: #{mlp_forward.1} parent=1 // pred_check_branch
      %16 = sbr.rel (0) target = $region5
    $region4: #{mlp_forward.1} parent=1 // pred_region
      _
    $region5: #{mlp_forward.1} parent=1 // pred_fallthru
      _
    // Predicated region
    $region6: #{mlp_forward.1} parent=1 // pred_check
      _
    $region7: #{mlp_forward.1} parent=1 // pred_check_branch
      %18 = sbr.rel (0) target = $region9
    $region8: #{mlp_forward.1} parent=1 // pred_region
      _
    $region9: #{mlp_forward.1} parent=1 // pred_fallthru
      _
    // Predicated region
    $region10: #{mlp_forward.1} parent=1 // pred_check
      _
    $region11: #{mlp_forward.1} parent=1 // pred_check_branch
      %20 = sbr.rel (0) target = $region13
    $region12: #{mlp_forward.1} parent=1 // pred_region
      _
    $region13: #{mlp_forward.1} parent=1 // pred_fallthru
      _
    // Predicated region
    $region14: #{mlp_forward.1} parent=1 // pred_check
      _
    $region15: #{mlp_forward.1} parent=1 // pred_check_branch
      %22 = sbr.rel (0) target = $region17
    $region16: #{mlp_forward.1} parent=1 // pred_region
      _
    $region17: #{mlp_forward.1} parent=1 // pred_fallthru
      _
    // Predicated region
    $region18: #{mlp_forward.1} parent=1 // pred_check
      _
    $region19: #{mlp_forward.1} parent=1 // pred_check_branch
      %24 = sbr.rel (0) target = $region21
    $region20: #{mlp_forward.1} parent=1 // pred_region
      _
    $region21: #{mlp_forward.1} parent=1 // pred_fallthru
      _
    // Predicated region
    $region22: #{mlp_forward.1} parent=1 // pred_check
      _
    $region23: #{mlp_forward.1} parent=1 // pred_check_branch
      %26 = sbr.rel (0) target = $region25
    $region24: #{mlp_forward.1} parent=1 // pred_region
      _
    $region25: #{mlp_forward.1} parent=1 // pred_fallthru
      _
    // Predicated region
    $region26: #{mlp_forward.1} parent=1 // pred_check
      _
    $region27: #{mlp_forward.1} parent=1 // pred_check_branch
      %28 = sbr.rel (0) target = $region29
    $region28: #{mlp_forward.1} parent=1 // pred_region
      _
    $region29: #{mlp_forward.1} parent=1 // pred_fallthru
      _
    // Predicated region
    $region30: #{mlp_forward.1} parent=1 // pred_check
      _
    $region31: #{mlp_forward.1} parent=1 // pred_check_branch
      %30 = sbr.rel (0) target = $region33
    $region32: #{mlp_forward.1} parent=1 // pred_region
      _
    $region33: #{mlp_forward.1} parent=1 // pred_fallthru
      _
    // Predicated region
    $region34: #{mlp_forward.1} parent=1 // pred_check
      _
    $region35: #{mlp_forward.1} parent=1 // pred_check_branch
      %32 = sbr.rel (0) target = $region37
    $region36: #{mlp_forward.1} parent=1 // pred_region
      _
    $region37: #{mlp_forward.1} parent=1 // pred_fallthru
      _
    %v33 = vld [vmem:[%s0] sm:$0xff]
    %v34 = vld [vmem:[%s0 + $0x8] sm:$0x3f]
    %v35 = vld [vmem:[%s1] sm:$0xff]
    %v36 = vld [vmem:[%s1 + $0x8] sm:$0xff]
    %v37 = vld [vmem:[%s1 + $0x10] sm:$0xff]
    %v38 = vld [vmem:[%s1 + $0x18] sm:$0xff]
    %v39 = vld [vmem:[%s1 + $0x20] sm:$0xff]
    %v40 = vld [vmem:[%s1 + $0x28] sm:$0xff]
    %v41 = vld [vmem:[%s1 + $0x30] sm:$0xff]
    %v42 = vld [vmem:[%s1 + $0x38] sm:$0xff]
    %v43 = vld [vmem:[%s1 + $0x40] sm:$0xff]
    %v44 = vld [vmem:[%s1 + $0x48] sm:$0xff]
    %v45 = vld [vmem:[%s1 + $0x50] sm:$0xff]
    %v46 = vld [vmem:[%s1 + $0x58] sm:$0xff]
    %v47 = vld [vmem:[%s1 + $0x60] sm:$0xff]
    %v48 = vld [vmem:[%s1 + $0x68] sm:$0xff]
    %v49 = vld [vmem:[%s1 + $0x70] sm:$0xff]
    %v50 = vld [vmem:[%s1 + $0x78] sm:$0xff]
    %v51 = vld [vmem:[%s1 + $0x80] sm:$0xff]
    %v52 = vld [vmem:[%s1 + $0x88] sm:$0xff]
    %v53 = vld [vmem:[%s1 + $0x90] sm:$0xff]
    %v54 = vld [vmem:[%s1 + $0x98] sm:$0xff]
    %v55 = vld [vmem:[%s1 + $0xa0] sm:$0xff]
    %v56 = vld [vmem:[%s1 + $0xa8] sm:$0xff]
    %v57 = vld [vmem:[%s1 + $0xb0] sm:$0xff]
    %v58 = vld [vmem:[%s1 + $0xb8] sm:$0xff]
    %v59 = vld [vmem:[%s1 + $0xc0] sm:$0xff]
    %v60 = vld [vmem:[%s1 + $0xc8] sm:$0xff]
    %v61 = vld [vmem:[%s1 + $0xd0] sm:$0xff]
    %v62 = vld [vmem:[%s1 + $0xd8] sm:$0xff]
    %v63 = vld [vmem:[%s1 + $0xe0] sm:$0xff]
    %v64 = vld [vmem:[%s1 + $0xe8] sm:$0xff]
    %v65 = vld [vmem:[%s1 + $0xf0] sm:$0xff]
    %v66 = vld [vmem:[%s1 + $0xf8] sm:$0xff]
    %v67 = vld [vmem:[%s1 + $0x100] sm:$0xff]
    %v68 = vld [vmem:[%s1 + $0x108] sm:$0xff]
    %v69 = vld [vmem:[%s1 + $0x110] sm:$0xff]
    %v70 = vld [vmem:[%s1 + $0x118] sm:$0xff]
    %v71 = vld [vmem:[%s1 + $0x120] sm:$0xff]
    %v72 = vld [vmem:[%s1 + $0x128] sm:$0xff]
    %v73 = vld [vmem:[%s1 + $0x130] sm:$0xff]
    %v74 = vld [vmem:[%s1 + $0x138] sm:$0xff]
    %v75 = vld [vmem:[%s1 + $0x140] sm:$0xff]
    %v76 = vld [vmem:[%s1 + $0x148] sm:$0xff]
    %v77 = vld [vmem:[%s1 + $0x150] sm:$0xff]
    %v78 = vld [vmem:[%s1 + $0x158] sm:$0xff]
    %v79 = vld [vmem:[%s1 + $0x160] sm:$0xff]
    %v80 = vld [vmem:[%s1 + $0x168] sm:$0xff]
    %v81 = vld [vmem:[%s1 + $0x170] sm:$0xff]
    %v82 = vld [vmem:[%s1 + $0x178] sm:$0xff]
    %v83 = vld [vmem:[%s1 + $0x180] sm:$0xff]
    %v84 = vld [vmem:[%s1 + $0x188] sm:$0xff]
    %v85 = vld [vmem:[%s1 + $0x190] sm:$0xff]
    %v86 = vld [vmem:[%s1 + $0x198] sm:$0xff]
    %v87 = vld [vmem:[%s1 + $0x1a0] sm:$0xff]
    %v88 = vld [vmem:[%s1 + $0x1a8] sm:$0xff]
    %v89 = vld [vmem:[%s1 + $0x1b0] sm:$0xff]
    %v90 = vld [vmem:[%s1 + $0x1b8] sm:$0xff]
    %v91 = vld [vmem:[%s1 + $0x1c0] sm:$0xff]
    %v92 = vld [vmem:[%s1 + $0x1c8] sm:$0xff]
    %v93 = vld [vmem:[%s1 + $0x1d0] sm:$0xff]
    %v94 = vld [vmem:[%s1 + $0x1d8] sm:$0xff]
    %v95 = vld [vmem:[%s1 + $0x1e0] sm:$0xff]
    %v96 = vld [vmem:[%s1 + $0x1e8] sm:$0xff]
    %v97 = vld [vmem:[%s1 + $0x1f0] sm:$0xff]
    %v98 = vld [vmem:[%s1 + $0x1f8] sm:$0xff]
    %v99 = vld [vmem:[%s1 + $0x200] sm:$0xff]
    %v100 = vld [vmem:[%s1 + $0x208] sm:$0xff]
    %v101 = vld [vmem:[%s1 + $0x210] sm:$0xff]
    %v102 = vld [vmem:[%s1 + $0x218] sm:$0xff]
    %v103 = vld [vmem:[%s1 + $0x220] sm:$0xff]
    %v104 = vld [vmem:[%s1 + $0x228] sm:$0xff]
    %v105 = vld [vmem:[%s1 + $0x230] sm:$0xff]
    %v106 = vld [vmem:[%s1 + $0x238] sm:$0xff]
    %v107 = vld [vmem:[%s1 + $0x240] sm:$0xff]
    %v108 = vld [vmem:[%s1 + $0x248] sm:$0xff]
    %v109 = vld [vmem:[%s1 + $0x250] sm:$0xff]
    %v110 = vld [vmem:[%s1 + $0x258] sm:$0xff]
    %v111 = vld [vmem:[%s1 + $0x260] sm:$0xff]
    %v112 = vld [vmem:[%s1 + $0x268] sm:$0xff]
    %v113 = vld [vmem:[%s1 + $0x270] sm:$0xff]
    %v114 = vld [vmem:[%s1 + $0x278] sm:$0xff]
    %v115 = vld [vmem:[%s1 + $0x280] sm:$0xff]
    %v116 = vld [vmem:[%s1 + $0x288] sm:$0xff]
    %v117 = vld [vmem:[%s1 + $0x290] sm:$0xff]
    %v118 = vld [vmem:[%s1 + $0x298] sm:$0xff]
    %v119 = vld [vmem:[%s1 + $0x2a0] sm:$0xff]
    %v120 = vld [vmem:[%s1 + $0x2a8] sm:$0xff]
    %v121 = vld [vmem:[%s1 + $0x2b0] sm:$0xff]
    %v122 = vld [vmem:[%s1 + $0x2b8] sm:$0xff]
    %v123 = vld [vmem:[%s1 + $0x2c0] sm:$0xff]
    %v124 = vld [vmem:[%s1 + $0x2c8] sm:$0xff]
    %v125 = vld [vmem:[%s1 + $0x2d0] sm:$0xff]
    %v126 = vld [vmem:[%s1 + $0x2d8] sm:$0xff]
    %v127 = vld [vmem:[%s1 + $0x2e0] sm:$0xff]
    %v128 = vld [vmem:[%s1 + $0x2e8] sm:$0xff]
    %v129 = vld [vmem:[%s1 + $0x2f0] sm:$0xff]
    %v130 = vld [vmem:[%s1 + $0x2f8] sm:$0xff]
    %v131 = vld [vmem:[%s1 + $0x300] sm:$0xff]
    %v132 = vld [vmem:[%s1 + $0x308] sm:$0xff]
    %v133 = vld [vmem:[%s2] sm:$0x1]
    %v135 = vlaneseq
    %v136 = vshrl.u32 %v135, 7
    %v137 = vsub.s32 0, %v136
    %v138 = vrot.slane %v133, %v137
    %v142 = vcombine.high %v33, %v33
    %v144 = vunpack.c.l.s4 1983009808
    %v145 = vunpack.c.0.s8 %v144
    %v146 = vlaneseq
    %v147 = vshrl.u32 %v146, 7
    %v148 = vsub.s32 %v145, %v147
    %v149 = vrot.slane %v33, %v148
    %v151 = vunpack.c.l.s4 1983009808
    %v152 = vunpack.c.0.s8 %v151
    %v153 = vlaneseq
    %v154 = vshrl.u32 %v153, 7
    %v155 = vsub.s32 %v152, %v154
    %v156 = vrot.slane %v142, %v155
    %v157 = vcombine.high %v149, %v149
    %v158 = vcombine.high %v156, %v156
    %v159 = vcombine.high %v34, %v34
    %v161 = vunpack.c.l.s4 1983009808
    %v162 = vunpack.c.0.s8 %v161
    %v163 = vlaneseq
    %v164 = vshrl.u32 %v163, 7
    %v165 = vsub.s32 %v162, %v164
    %v166 = vrot.slane %v34, %v165
    %v168 = vunpack.c.l.s4 1983009808
    %v169 = vunpack.c.0.s8 %v168
    %v170 = vlaneseq
    %v171 = vshrl.u32 %v170, 7
    %v172 = vsub.s32 %v169, %v171
    %v173 = vrot.slane %v159, %v172
    %v174 = vcombine.high %v166, %v166
    %vm181 = vcmask 130048
    %v182 = vsel %vm181, %v173, 0
    %184 = vmatprep.subr.mxu0 0.0
    %185 = vmatpush1.msra.mxu0 %v35
    %186 = vmatprep.subr.mxu0 0.0
    %187 = vmatpush1.msra.mxu0 %v36
    %188 = vmatprep.subr.mxu0 0.0
    %189 = vmatpush1.msra.mxu0 %v37
    %190 = vmatprep.subr.mxu0 0.0
    %191 = vmatpush1.msra.mxu0 %v38
    %192 = vmatprep.subr.mxu0 0.0
    %193 = vmatpush1.msra.mxu0 %v39
    %194 = vmatprep.subr.mxu0 0.0
    %195 = vmatpush1.msra.mxu0 %v40
    %196 = vmatprep.subr.mxu0 0.0
    %197 = vmatpush1.msra.mxu0 %v41
    %198 = vmatprep.subr.mxu0 0.0
    %199 = vmatpush1.msra.mxu0 %v42
    %200 = vmatprep.subr.mxu0 0.0
    %201 = vmatpush1.msra.mxu0 %v43
    %202 = vmatprep.subr.mxu0 0.0
    %203 = vmatpush1.msra.mxu0 %v44
    %204 = vmatprep.subr.mxu0 0.0
    %205 = vmatpush1.msra.mxu0 %v45
    %206 = vmatprep.subr.mxu0 0.0
    %207 = vmatpush1.msra.mxu0 %v46
    %208 = vmatprep.subr.mxu0 0.0
    %209 = vmatpush1.msra.mxu0 %v47
    %210 = vmatprep.subr.mxu0 0.0
    %211 = vmatpush1.msra.mxu0 %v48
    %212 = vmatprep.subr.mxu0 0.0
    %213 = vmatpush1.msra.mxu0 %v49
    %214 = vmatprep.subr.mxu0 0.0
    %215 = vmatpush1.msra.mxu0 %v50
    %216 = vmatprep.subr.mxu0 0.0
    %217 = vmatpush1.msra.mxu0 %v51
    %218 = vmatprep.subr.mxu0 0.0
    %219 = vmatpush1.msra.mxu0 %v52
    %220 = vmatprep.subr.mxu0 0.0
    %221 = vmatpush1.msra.mxu0 %v53
    %222 = vmatprep.subr.mxu0 0.0
    %223 = vmatpush1.msra.mxu0 %v54
    %224 = vmatprep.subr.mxu0 0.0
    %225 = vmatpush1.msra.mxu0 %v55
    %226 = vmatprep.subr.mxu0 0.0
    %227 = vmatpush1.msra.mxu0 %v56
    %228 = vmatprep.subr.mxu0 0.0
    %229 = vmatpush1.msra.mxu0 %v57
    %230 = vmatprep.subr.mxu0 0.0
    %231 = vmatpush1.msra.mxu0 %v58
    %232 = vmatprep.subr.mxu0 0.0
    %233 = vmatpush1.msra.mxu0 %v59
    %234 = vmatprep.subr.mxu0 0.0
    %235 = vmatpush1.msra.mxu0 %v60
    %236 = vmatprep.subr.mxu0 0.0
    %237 = vmatpush1.msra.mxu0 %v61
    %238 = vmatprep.subr.mxu0 0.0
    %239 = vmatpush1.msra.mxu0 %v62
    %240 = vmatprep.subr.mxu0 0.0
    %241 = vmatpush1.msra.mxu0 %v63
    %242 = vmatprep.subr.mxu0 0.0
    %243 = vmatpush1.msra.mxu0 %v64
    %244 = vmatprep.subr.mxu0 0.0
    %245 = vmatpush1.msra.mxu0 %v65
    %246 = vmatprep.subr.mxu0 0.0
    %247 = vmatpush1.msra.mxu0 %v66
    %248 = vmatprep.mubr.f32.mxu0 %v157
    %249 = vmatmul.mubr.f32.gmra.mrb[0].mxu0 %v149
    %v250 = vpop.f32.mrb[0].mxu0
    %v251 = vadd.f32 %v138, %v250
    %v252 = vpop.f32.mrb[0].mxu0
    %253 = vdwg.mxu0
    %254 = vmatprep.subr.mxu0 0.0
    %255 = vmatpush1.msra.mxu0 %v67
    %256 = vmatprep.subr.mxu0 0.0
    %257 = vmatpush1.msra.mxu0 %v68
    %258 = vmatprep.subr.mxu0 0.0
    %259 = vmatpush1.msra.mxu0 %v69
    %260 = vmatprep.subr.mxu0 0.0
    %261 = vmatpush1.msra.mxu0 %v70
    %262 = vmatprep.subr.mxu0 0.0
    %263 = vmatpush1.msra.mxu0 %v71
    %264 = vmatprep.subr.mxu0 0.0
    %265 = vmatpush1.msra.mxu0 %v72
    %266 = vmatprep.subr.mxu0 0.0
    %267 = vmatpush1.msra.mxu0 %v73
    %268 = vmatprep.subr.mxu0 0.0
    %269 = vmatpush1.msra.mxu0 %v74
    %270 = vmatprep.subr.mxu0 0.0
    %271 = vmatpush1.msra.mxu0 %v75
    %272 = vmatprep.subr.mxu0 0.0
    %273 = vmatpush1.msra.mxu0 %v76
    %274 = vmatprep.subr.mxu0 0.0
    %275 = vmatpush1.msra.mxu0 %v77
    %276 = vmatprep.subr.mxu0 0.0
    %277 = vmatpush1.msra.mxu0 %v78
    %278 = vmatprep.subr.mxu0 0.0
    %279 = vmatpush1.msra.mxu0 %v79
    %280 = vmatprep.subr.mxu0 0.0
    %281 = vmatpush1.msra.mxu0 %v80
    %282 = vmatprep.subr.mxu0 0.0
    %283 = vmatpush1.msra.mxu0 %v81
    %284 = vmatprep.subr.mxu0 0.0
    %285 = vmatpush1.msra.mxu0 %v82
    %286 = vmatprep.subr.mxu0 0.0
    %287 = vmatpush1.msra.mxu0 %v83
    %288 = vmatprep.subr.mxu0 0.0
    %289 = vmatpush1.msra.mxu0 %v84
    %290 = vmatprep.subr.mxu0 0.0
    %291 = vmatpush1.msra.mxu0 %v85
    %292 = vmatprep.subr.mxu0 0.0
    %293 = vmatpush1.msra.mxu0 %v86
    %294 = vmatprep.subr.mxu0 0.0
    %295 = vmatpush1.msra.mxu0 %v87
    %296 = vmatprep.subr.mxu0 0.0
    %297 = vmatpush1.msra.mxu0 %v88
    %298 = vmatprep.subr.mxu0 0.0
    %299 = vmatpush1.msra.mxu0 %v89
    %300 = vmatprep.subr.mxu0 0.0
    %301 = vmatpush1.msra.mxu0 %v90
    %302 = vmatprep.subr.mxu0 0.0
    %303 = vmatpush1.msra.mxu0 %v91
    %304 = vmatprep.subr.mxu0 0.0
    %305 = vmatpush1.msra.mxu0 %v92
    %306 = vmatprep.subr.mxu0 0.0
    %307 = vmatpush1.msra.mxu0 %v93
    %308 = vmatprep.subr.mxu0 0.0
    %309 = vmatpush1.msra.mxu0 %v94
    %310 = vmatprep.subr.mxu0 0.0
    %311 = vmatpush1.msra.mxu0 %v95
    %312 = vmatprep.subr.mxu0 0.0
    %313 = vmatpush1.msra.mxu0 %v96
    %314 = vmatprep.subr.mxu0 0.0
    %315 = vmatpush1.msra.mxu0 %v97
    %316 = vmatprep.subr.mxu0 0.0
    %317 = vmatpush1.msra.mxu0 %v98
    %318 = vmatprep.mubr.f32.mxu0 %v158
    %319 = vmatmul.mubr.f32.gmra.mrb[0].mxu0 %v156
    %v320 = vpop.f32.mrb[0].mxu0
    %v321 = vadd.f32 %v251, %v320
    %v322 = vpop.f32.mrb[0].mxu0
    %323 = vdwg.mxu0
    %324 = vmatprep.subr.mxu0 0.0
    %325 = vmatpush1.msra.mxu0 %v99
    %326 = vmatprep.subr.mxu0 0.0
    %327 = vmatpush1.msra.mxu0 %v100
    %328 = vmatprep.subr.mxu0 0.0
    %329 = vmatpush1.msra.mxu0 %v101
    %330 = vmatprep.subr.mxu0 0.0
    %331 = vmatpush1.msra.mxu0 %v102
    %332 = vmatprep.subr.mxu0 0.0
    %333 = vmatpush1.msra.mxu0 %v103
    %334 = vmatprep.subr.mxu0 0.0
    %335 = vmatpush1.msra.mxu0 %v104
    %336 = vmatprep.subr.mxu0 0.0
    %337 = vmatpush1.msra.mxu0 %v105
    %338 = vmatprep.subr.mxu0 0.0
    %339 = vmatpush1.msra.mxu0 %v106
    %340 = vmatprep.subr.mxu0 0.0
    %341 = vmatpush1.msra.mxu0 %v107
    %342 = vmatprep.subr.mxu0 0.0
    %343 = vmatpush1.msra.mxu0 %v108
    %344 = vmatprep.subr.mxu0 0.0
    %345 = vmatpush1.msra.mxu0 %v109
    %346 = vmatprep.subr.mxu0 0.0
    %347 = vmatpush1.msra.mxu0 %v110
    %348 = vmatprep.subr.mxu0 0.0
    %349 = vmatpush1.msra.mxu0 %v111
    %350 = vmatprep.subr.mxu0 0.0
    %351 = vmatpush1.msra.mxu0 %v112
    %352 = vmatprep.subr.mxu0 0.0
    %353 = vmatpush1.msra.mxu0 %v113
    %354 = vmatprep.subr.mxu0 0.0
    %355 = vmatpush1.msra.mxu0 %v114
    %356 = vmatprep.subr.mxu0 0.0
    %357 = vmatpush1.msra.mxu0 %v115
    %358 = vmatprep.subr.mxu0 0.0
    %359 = vmatpush1.msra.mxu0 %v116
    %360 = vmatprep.subr.mxu0 0.0
    %361 = vmatpush1.msra.mxu0 %v117
    %362 = vmatprep.subr.mxu0 0.0
    %363 = vmatpush1.msra.mxu0 %v118
    %364 = vmatprep.subr.mxu0 0.0
    %365 = vmatpush1.msra.mxu0 %v119
    %366 = vmatprep.subr.mxu0 0.0
    %367 = vmatpush1.msra.mxu0 %v120
    %368 = vmatprep.subr.mxu0 0.0
    %369 = vmatpush1.msra.mxu0 %v121
    %370 = vmatprep.subr.mxu0 0.0
    %371 = vmatpush1.msra.mxu0 %v122
    %372 = vmatprep.subr.mxu0 0.0
    %373 = vmatpush1.msra.mxu0 %v123
    %374 = vmatprep.subr.mxu0 0.0
    %375 = vmatpush1.msra.mxu0 %v124
    %376 = vmatprep.subr.mxu0 0.0
    %377 = vmatpush1.msra.mxu0 %v125
    %378 = vmatprep.subr.mxu0 0.0
    %379 = vmatpush1.msra.mxu0 %v126
    %380 = vmatprep.subr.mxu0 0.0
    %381 = vmatpush1.msra.mxu0 %v127
    %382 = vmatprep.subr.mxu0 0.0
    %383 = vmatpush1.msra.mxu0 %v128
    %384 = vmatprep.subr.mxu0 0.0
    %385 = vmatpush1.msra.mxu0 %v129
    %386 = vmatprep.subr.mxu0 0.0
    %387 = vmatpush1.msra.mxu0 %v130
    %388 = vmatprep.mubr.f32.mxu0 %v174
    %389 = vmatmul.mubr.f32.gmra.mrb[0].mxu0 %v166
    %v390 = vpop.f32.mrb[0].mxu0
    %v391 = vadd.f32 %v321, %v390
    %v392 = vpop.f32.mrb[0].mxu0
    %393 = vdwg.mxu0
    %394 = vmatprep.subr.mxu0 0.0
    %395 = vmatpush1.msra.mxu0 %v131
    %396 = vmatprep.subr.mxu0 0.0
    %397 = vmatpush1.msra.mxu0 %v132
    %398 = vmatprep.subr.mxu0 0.0
    %399 = vmatpush1.msra.mxu0 0.0
    %400 = vmatprep.subr.mxu0 0.0
    %401 = vmatpush1.msra.mxu0 0.0
    %402 = vmatprep.subr.mxu0 0.0
    %403 = vmatpush1.msra.mxu0 0.0
    %404 = vmatprep.subr.mxu0 0.0
    %405 = vmatpush1.msra.mxu0 0.0
    %406 = vmatprep.subr.mxu0 0.0
    %407 = vmatpush1.msra.mxu0 0.0
    %408 = vmatprep.subr.mxu0 0.0
    %409 = vmatpush1.msra.mxu0 0.0
    %410 = vmatprep.subr.mxu0 0.0
    %411 = vmatpush1.msra.mxu0 0.0
    %412 = vmatprep.subr.mxu0 0.0
    %413 = vmatpush1.msra.mxu0 0.0
    %414 = vmatprep.subr.mxu0 0.0
    %415 = vmatpush1.msra.mxu0 0.0
    %416 = vmatprep.subr.mxu0 0.0
    %417 = vmatpush1.msra.mxu0 0.0
    %418 = vmatprep.subr.mxu0 0.0
    %419 = vmatpush1.msra.mxu0 0.0
    %420 = vmatprep.subr.mxu0 0.0
    %421 = vmatpush1.msra.mxu0 0.0
    %422 = vmatprep.subr.mxu0 0.0
    %423 = vmatpush1.msra.mxu0 0.0
    %424 = vmatprep.subr.mxu0 0.0
    %425 = vmatpush1.msra.mxu0 0.0
    %426 = vmatprep.subr.mxu0 0.0
    %427 = vmatpush1.msra.mxu0 0.0
    %428 = vmatprep.subr.mxu0 0.0
    %429 = vmatpush1.msra.mxu0 0.0
    %430 = vmatprep.subr.mxu0 0.0
    %431 = vmatpush1.msra.mxu0 0.0
    %432 = vmatprep.subr.mxu0 0.0
    %433 = vmatpush1.msra.mxu0 0.0
    %434 = vmatprep.subr.mxu0 0.0
    %435 = vmatpush1.msra.mxu0 0.0
    %436 = vmatprep.subr.mxu0 0.0
    %437 = vmatpush1.msra.mxu0 0.0
    %438 = vmatprep.subr.mxu0 0.0
    %439 = vmatpush1.msra.mxu0 0.0
    %440 = vmatprep.subr.mxu0 0.0
    %441 = vmatpush1.msra.mxu0 0.0
    %442 = vmatprep.subr.mxu0 0.0
    %443 = vmatpush1.msra.mxu0 0.0
    %444 = vmatprep.subr.mxu0 0.0
    %445 = vmatpush1.msra.mxu0 0.0
    %446 = vmatprep.subr.mxu0 0.0
    %447 = vmatpush1.msra.mxu0 0.0
    %448 = vmatprep.subr.mxu0 0.0
    %449 = vmatpush1.msra.mxu0 0.0
    %450 = vmatprep.subr.mxu0 0.0
    %451 = vmatpush1.msra.mxu0 0.0
    %452 = vmatprep.subr.mxu0 0.0
    %453 = vmatpush1.msra.mxu0 0.0
    %454 = vmatprep.subr.mxu0 0.0
    %455 = vmatpush1.msra.mxu0 0.0
    %456 = vmatprep.subr.mxu0 0.0
    %457 = vmatpush1.msra.mxu0 0.0
    %458 = vmatprep.mubr.f32.mxu0 0.0
    %459 = vmatmul.mubr.f32.gmra.mrb[0].mxu0 %v182
    %v460 = vpop.f32.mrb[0].mxu0
    %v461 = vadd.f32 %v391, %v460
    %v462 = vpop.f32.mrb[0].mxu0
    %463 = vdwg.mxu0
    %v464 = vmax.f32 %v461, 0.0
    %v465 = vld [vmem:[%s3] sm:$0xff]
    %v466 = vld [vmem:[%s3 + $0x8] sm:$0xff]
    %v467 = vld [vmem:[%s3 + $0x10] sm:$0xff]
    %v468 = vld [vmem:[%s3 + $0x18] sm:$0xff]
    %v469 = vld [vmem:[%s4] sm:$0x1]
    %v471 = vlaneseq
    %v472 = vshrl.u32 %v471, 7
    %v473 = vsub.s32 0, %v472
    %v474 = vrot.slane %v469, %v473
    %vm476 = vcmask 261120
    %v478 = vsel %vm476, %v464, 0
    %480 = vmatprep.subr.mxu0 0.0
    %481 = vmatpush1.msra.mxu0 %v465
    %482 = vmatprep.subr.mxu0 0.0
    %483 = vmatpush1.msra.mxu0 %v466
    %484 = vmatprep.subr.mxu0 0.0
    %485 = vmatpush1.msra.mxu0 %v467
    %486 = vmatprep.subr.mxu0 0.0
    %487 = vmatpush1.msra.mxu0 %v468
    %488 = vmatprep.subr.mxu0 0.0
    %489 = vmatpush1.msra.mxu0 0.0
    %490 = vmatprep.subr.mxu0 0.0
    %491 = vmatpush1.msra.mxu0 0.0
    %492 = vmatprep.subr.mxu0 0.0
    %493 = vmatpush1.msra.mxu0 0.0
    %494 = vmatprep.subr.mxu0 0.0
    %495 = vmatpush1.msra.mxu0 0.0
    %496 = vmatprep.subr.mxu0 0.0
    %497 = vmatpush1.msra.mxu0 0.0
    %498 = vmatprep.subr.mxu0 0.0
    %499 = vmatpush1.msra.mxu0 0.0
    %500 = vmatprep.subr.mxu0 0.0
    %501 = vmatpush1.msra.mxu0 0.0
    %502 = vmatprep.subr.mxu0 0.0
    %503 = vmatpush1.msra.mxu0 0.0
    %504 = vmatprep.subr.mxu0 0.0
    %505 = vmatpush1.msra.mxu0 0.0
    %506 = vmatprep.subr.mxu0 0.0
    %507 = vmatpush1.msra.mxu0 0.0
    %508 = vmatprep.subr.mxu0 0.0
    %509 = vmatpush1.msra.mxu0 0.0
    %510 = vmatprep.subr.mxu0 0.0
    %511 = vmatpush1.msra.mxu0 0.0
    %512 = vmatprep.subr.mxu0 0.0
    %513 = vmatpush1.msra.mxu0 0.0
    %514 = vmatprep.subr.mxu0 0.0
    %515 = vmatpush1.msra.mxu0 0.0
    %516 = vmatprep.subr.mxu0 0.0
    %517 = vmatpush1.msra.mxu0 0.0
    %518 = vmatprep.subr.mxu0 0.0
    %519 = vmatpush1.msra.mxu0 0.0
    %520 = vmatprep.subr.mxu0 0.0
    %521 = vmatpush1.msra.mxu0 0.0
    %522 = vmatprep.subr.mxu0 0.0
    %523 = vmatpush1.msra.mxu0 0.0
    %524 = vmatprep.subr.mxu0 0.0
    %525 = vmatpush1.msra.mxu0 0.0
    %526 = vmatprep.subr.mxu0 0.0
    %527 = vmatpush1.msra.mxu0 0.0
    %528 = vmatprep.subr.mxu0 0.0
    %529 = vmatpush1.msra.mxu0 0.0
    %530 = vmatprep.subr.mxu0 0.0
    %531 = vmatpush1.msra.mxu0 0.0
    %532 = vmatprep.subr.mxu0 0.0
    %533 = vmatpush1.msra.mxu0 0.0
    %534 = vmatprep.subr.mxu0 0.0
    %535 = vmatpush1.msra.mxu0 0.0
    %536 = vmatprep.subr.mxu0 0.0
    %537 = vmatpush1.msra.mxu0 0.0
    %538 = vmatprep.subr.mxu0 0.0
    %539 = vmatpush1.msra.mxu0 0.0
    %540 = vmatprep.subr.mxu0 0.0
    %541 = vmatpush1.msra.mxu0 0.0
    %542 = vmatprep.subr.mxu0 0.0
    %543 = vmatpush1.msra.mxu0 0.0
    %544 = vmatprep.mubr.f32.mxu0 0.0
    %545 = vmatmul.mubr.f32.gmra.mrb[0].mxu0 %v478
    %v546 = vpop.f32.mrb[0].mxu0
    %v547 = vadd.f32 %v474, %v546
    %v548 = vpop.f32.mrb[0].mxu0
    %549 = vdwg.mxu0
    %v550 = vmax.f32 %v547, 0.0
    %v551 = vld [vmem:[%s5] sm:$0xff]
    %v552 = vld [vmem:[%s5 + $0x8] sm:$0xff]
    %v553 = vld [vmem:[%s5 + $0x10] sm:$0xff]
    %v554 = vld [vmem:[%s5 + $0x18] sm:$0xff]
    %v555 = vld [vmem:[%s6] sm:$0x1]
    %v557 = vlaneseq
    %v558 = vshrl.u32 %v557, 7
    %v559 = vsub.s32 0, %v558
    %v560 = vrot.slane %v555, %v559
    %v563 = vsel %vm476, %v550, 0
    %565 = vmatprep.subr.mxu0 0.0
    %566 = vmatpush1.msra.mxu0 %v551
    %567 = vmatprep.subr.mxu0 0.0
    %568 = vmatpush1.msra.mxu0 %v552
    %569 = vmatprep.subr.mxu0 0.0
    %570 = vmatpush1.msra.mxu0 %v553
    %571 = vmatprep.subr.mxu0 0.0
    %572 = vmatpush1.msra.mxu0 %v554
    %573 = vmatprep.subr.mxu0 0.0
    %574 = vmatpush1.msra.mxu0 0.0
    %575 = vmatprep.subr.mxu0 0.0
    %576 = vmatpush1.msra.mxu0 0.0
    %577 = vmatprep.subr.mxu0 0.0
    %578 = vmatpush1.msra.mxu0 0.0
    %579 = vmatprep.subr.mxu0 0.0
    %580 = vmatpush1.msra.mxu0 0.0
    %581 = vmatprep.subr.mxu0 0.0
    %582 = vmatpush1.msra.mxu0 0.0
    %583 = vmatprep.subr.mxu0 0.0
    %584 = vmatpush1.msra.mxu0 0.0
    %585 = vmatprep.subr.mxu0 0.0
    %586 = vmatpush1.msra.mxu0 0.0
    %587 = vmatprep.subr.mxu0 0.0
    %588 = vmatpush1.msra.mxu0 0.0
    %589 = vmatprep.subr.mxu0 0.0
    %590 = vmatpush1.msra.mxu0 0.0
    %591 = vmatprep.subr.mxu0 0.0
    %592 = vmatpush1.msra.mxu0 0.0
    %593 = vmatprep.subr.mxu0 0.0
    %594 = vmatpush1.msra.mxu0 0.0
    %595 = vmatprep.subr.mxu0 0.0
    %596 = vmatpush1.msra.mxu0 0.0
    %597 = vmatprep.subr.mxu0 0.0
    %598 = vmatpush1.msra.mxu0 0.0
    %599 = vmatprep.subr.mxu0 0.0
    %600 = vmatpush1.msra.mxu0 0.0
    %601 = vmatprep.subr.mxu0 0.0
    %602 = vmatpush1.msra.mxu0 0.0
    %603 = vmatprep.subr.mxu0 0.0
    %604 = vmatpush1.msra.mxu0 0.0
    %605 = vmatprep.subr.mxu0 0.0
    %606 = vmatpush1.msra.mxu0 0.0
    %607 = vmatprep.subr.mxu0 0.0
    %608 = vmatpush1.msra.mxu0 0.0
    %609 = vmatprep.subr.mxu0 0.0
    %610 = vmatpush1.msra.mxu0 0.0
    %611 = vmatprep.subr.mxu0 0.0
    %612 = vmatpush1.msra.mxu0 0.0
    %613 = vmatprep.subr.mxu0 0.0
    %614 = vmatpush1.msra.mxu0 0.0
    %615 = vmatprep.subr.mxu0 0.0
    %616 = vmatpush1.msra.mxu0 0.0
    %617 = vmatprep.subr.mxu0 0.0
    %618 = vmatpush1.msra.mxu0 0.0
    %619 = vmatprep.subr.mxu0 0.0
    %620 = vmatpush1.msra.mxu0 0.0
    %621 = vmatprep.subr.mxu0 0.0
    %622 = vmatpush1.msra.mxu0 0.0
    %623 = vmatprep.subr.mxu0 0.0
    %624 = vmatpush1.msra.mxu0 0.0
    %625 = vmatprep.subr.mxu0 0.0
    %626 = vmatpush1.msra.mxu0 0.0
    %627 = vmatprep.subr.mxu0 0.0
    %628 = vmatpush1.msra.mxu0 0.0
    %629 = vmatprep.mubr.f32.mxu0 0.0
    %630 = vmatmul.mubr.f32.gmra.mrb[0].mxu0 %v563
    %v631 = vpop.f32.mrb[0].mxu0
    %v632 = vadd.f32 %v560, %v631
    %v633 = vpop.f32.mrb[0].mxu0
    %634 = vdwg.mxu0
    %v635 = vmax.f32 %v632, 0.0
    %v636 = vld [vmem:[%s7] sm:$0xff]
    %v637 = vld [vmem:[%s7 + $0x8] sm:$0xff]
    %v638 = vld [vmem:[%s7 + $0x10] sm:$0xff]
    %v639 = vld [vmem:[%s7 + $0x18] sm:$0xff]
    %v640 = vld [vmem:[%s8] sm:$0x1]
    %v642 = vlaneseq
    %v643 = vshrl.u32 %v642, 7
    %v644 = vsub.s32 0, %v643
    %v645 = vrot.slane %v640, %v644
    %v648 = vsel %vm476, %v635, 0
    %650 = vmatprep.subr.mxu0 0.0
    %651 = vmatpush1.msra.mxu0 %v636
    %652 = vmatprep.subr.mxu0 0.0
    %653 = vmatpush1.msra.mxu0 %v637
    %654 = vmatprep.subr.mxu0 0.0
    %655 = vmatpush1.msra.mxu0 %v638
    %656 = vmatprep.subr.mxu0 0.0
    %657 = vmatpush1.msra.mxu0 %v639
    %658 = vmatprep.subr.mxu0 0.0
    %659 = vmatpush1.msra.mxu0 0.0
    %660 = vmatprep.subr.mxu0 0.0
    %661 = vmatpush1.msra.mxu0 0.0
    %662 = vmatprep.subr.mxu0 0.0
    %663 = vmatpush1.msra.mxu0 0.0
    %664 = vmatprep.subr.mxu0 0.0
    %665 = vmatpush1.msra.mxu0 0.0
    %666 = vmatprep.subr.mxu0 0.0
    %667 = vmatpush1.msra.mxu0 0.0
    %668 = vmatprep.subr.mxu0 0.0
    %669 = vmatpush1.msra.mxu0 0.0
    %670 = vmatprep.subr.mxu0 0.0
    %671 = vmatpush1.msra.mxu0 0.0
    %672 = vmatprep.subr.mxu0 0.0
    %673 = vmatpush1.msra.mxu0 0.0
    %674 = vmatprep.subr.mxu0 0.0
    %675 = vmatpush1.msra.mxu0 0.0
    %676 = vmatprep.subr.mxu0 0.0
    %677 = vmatpush1.msra.mxu0 0.0
    %678 = vmatprep.subr.mxu0 0.0
    %679 = vmatpush1.msra.mxu0 0.0
    %680 = vmatprep.subr.mxu0 0.0
    %681 = vmatpush1.msra.mxu0 0.0
    %682 = vmatprep.subr.mxu0 0.0
    %683 = vmatpush1.msra.mxu0 0.0
    %684 = vmatprep.subr.mxu0 0.0
    %685 = vmatpush1.msra.mxu0 0.0
    %686 = vmatprep.subr.mxu0 0.0
    %687 = vmatpush1.msra.mxu0 0.0
    %688 = vmatprep.subr.mxu0 0.0
    %689 = vmatpush1.msra.mxu0 0.0
    %690 = vmatprep.subr.mxu0 0.0
    %691 = vmatpush1.msra.mxu0 0.0
    %692 = vmatprep.subr.mxu0 0.0
    %693 = vmatpush1.msra.mxu0 0.0
    %694 = vmatprep.subr.mxu0 0.0
    %695 = vmatpush1.msra.mxu0 0.0
    %696 = vmatprep.subr.mxu0 0.0
    %697 = vmatpush1.msra.mxu0 0.0
    %698 = vmatprep.subr.mxu0 0.0
    %699 = vmatpush1.msra.mxu0 0.0
    %700 = vmatprep.subr.mxu0 0.0
    %701 = vmatpush1.msra.mxu0 0.0
    %702 = vmatprep.subr.mxu0 0.0
    %703 = vmatpush1.msra.mxu0 0.0
    %704 = vmatprep.subr.mxu0 0.0
    %705 = vmatpush1.msra.mxu0 0.0
    %706 = vmatprep.subr.mxu0 0.0
    %707 = vmatpush1.msra.mxu0 0.0
    %708 = vmatprep.subr.mxu0 0.0
    %709 = vmatpush1.msra.mxu0 0.0
    %710 = vmatprep.subr.mxu0 0.0
    %711 = vmatpush1.msra.mxu0 0.0
    %712 = vmatprep.subr.mxu0 0.0
    %713 = vmatpush1.msra.mxu0 0.0
    %714 = vmatprep.mubr.f32.mxu0 0.0
    %715 = vmatmul.mubr.f32.gmra.mrb[0].mxu0 %v648
    %v716 = vpop.f32.mrb[0].mxu0
    %v717 = vadd.f32 %v645, %v716
    %v718 = vpop.f32.mrb[0].mxu0
    %719 = vdwg.mxu0
    %vm720 = vcmask 74752
    %721 = vst.msk [vmem:[#allocation2] sm:$0x3] %vm720, %v717
    // Predicated region
    $region38: #{mlp_forward.1} parent=1 // pred_check
      _
    $region39: #{mlp_forward.1} parent=1 // pred_check_branch
      %723 = sbr.rel (0) target = $region41
    $region40: #{mlp_forward.1} parent=1 // pred_region
      %s725 = ssub.s32 32, 32
      %726 = vsyncadd [#allocation3], %s725
      %s728 = sshll.u32 [#allocation2], 4
      %s729 = int_to_ptr.vmem [resolvable:$true] %s728
      %731 = dma.vmem_to_hbm [thread:$0]  %s729, 32, %s9, [#allocation3]
    $region41: #{mlp_forward.1} parent=1 // pred_fallthru
      _
    // Predicated region
    $region42: #{mlp_forward.1} parent=1 // pred_check
      _
    $region43: #{mlp_forward.1} parent=1 // pred_check_branch
      %733 = sbr.rel (0) target = $region45
    $region44: #{mlp_forward.1} parent=1 // pred_region
      %734 = dma.done [#allocation3], 32
    $region45: #{mlp_forward.1} parent=1 // pred_fallthru
      _
    %735 = vsyncpa [#allocation3], 1

</llo_original>
